<compile_context>
chip_gen: v6e
topology: v6e:2x2x1
jax: 0.10.0
libtpu: 0.0.40
codegen_flags: <defaults>
</compile_context>

<pallas_src>
import math
import jax
import jax.numpy as jnp
from jax import lax
from jax.experimental import pallas as pl
from jax.experimental.pallas import tpu as pltpu

_MIB = 1 << 20
# VMEM budget (bytes) allowed for the double-buffered resident panel; leaves
# ample headroom even on v7x's 64 MiB per-TensorCore VMEM once tiles/outputs
# are added on top.
_RESIDENT_BUDGET = 16 * _MIB


def _round_up(x, m):
    return ((x + m - 1) // m) * m


def _make_kernel(tb, b_resident):
    """Kernel computing one (TA, TB) tile of scale * a @ b.T and its transpose."""

    def kernel(scale_ref, a_ref, b_ref, ab_ref, ba_ref):
        # scale_ref: SMEM (1,) f32 holding exp(logit_scale)
        # a_ref: (TA, D) VMEM tile
        # b_ref: (TB, D) VMEM tile, or the full (B_pad, D) panel if resident
        # ab_ref: (TA, TB) output tile of a @ b.T
        # ba_ref: (TB, TA) output tile of b @ a.T (= transpose of the above)
        scale = scale_ref[0]
        a = a_ref[...]  # native dtype (bf16 goes straight to the MXU)
        if b_resident:
            j = pl.program_id(1)
            start = pl.multiple_of(j * tb, 128)
            b = b_ref[pl.ds(start, tb), :]
        else:
            b = b_ref[...]

        # Single MXU matmul with f32 accumulation.
        ab = lax.dot_general(
            a, b,
            dimension_numbers=(((1,), (1,)), ((), ())),
            preferred_element_type=jnp.float32,
        )
        scaled = scale * ab
        ab_ref[...] = scaled.astype(ab_ref.dtype)
        # XLU transpose (separate issue slot from the MXU) instead of a second
        # matmul: exact transpose and no duplicated MXU cycles (key on v5e).
        ba_ref[...] = scaled.T.astype(ba_ref.dtype)

    return kernel


def _clip_matmul(a, b, scale_arr, ta, tb):
    """Returns (scale * a @ b.T, its exact transpose). a: [A, D], b: [B, D]."""
    A, D = a.shape
    B = b.shape[0]
    out_dtype = a.dtype
    in_itemsize = jnp.dtype(a.dtype).itemsize
    out_itemsize = jnp.dtype(out_dtype).itemsize

    # Adaptive tiles: lane-dense (multiples of 128) output blocks, at most one
    # tile's worth of padding per axis.
    TA = min(ta, _round_up(max(A, 1), 128))
    TB = min(tb, _round_up(max(B, 1), 128))
    A_pad = _round_up(max(A, 1), TA)
    B_pad = _round_up(max(B, 1), TB)

    # Keep >= 2 grid points along a parallel axis when possible so both v7x
    # TensorCores get work.
    if A_pad // TA == 1 and B_pad // TB == 1:
        if TA >= 256 and TA % 256 == 0:
            TA //= 2
        elif TB >= 256 and TB % 256 == 0:
            TB //= 2
    grid = (A_pad // TA, B_pad // TB)

    # Hold the whole `b` panel in VMEM when it fits: it is then DMA'd from HBM
    # exactly once instead of once per outer grid step.
    b_resident = grid[1] > 1 and (2 * B_pad * D * in_itemsize) <= _RESIDENT_BUDGET

    if A_pad != A:
        a = jnp.pad(a, ((0, A_pad - A), (0, 0)))
    if B_pad != B:
        b = jnp.pad(b, ((0, B_pad - B), (0, 0)))

    if b_resident:
        b_spec = pl.BlockSpec((B_pad, D), lambda i, j: (0, 0))
        b_read_bytes = B_pad * D * in_itemsize
    else:
        b_spec = pl.BlockSpec((TB, D), lambda i, j: (j, 0))
        b_read_bytes = grid[0] * B_pad * D * in_itemsize

    # VMEM limit from the real footprint (double-buffered inputs/outputs plus
    # f32 accumulator/transpose temporaries) with headroom — never the whole
    # physical VMEM.
    footprint = (
        2 * TA * D * in_itemsize
        + 2 * (B_pad if b_resident else TB) * D * in_itemsize
        + 4 * TA * TB * out_itemsize          # two double-buffered output tiles
        + 2 * TA * TB * 4                     # f32 matmul result + transpose
    )
    vmem_limit = max(16 * _MIB, min(int(1.5 * footprint) + 2 * _MIB, 48 * _MIB))

    out_ab, out_ba = pl.pallas_call(
        _make_kernel(TB, b_resident),
        out_shape=(
            jax.ShapeDtypeStruct((A_pad, B_pad), out_dtype),
            jax.ShapeDtypeStruct((B_pad, A_pad), out_dtype),
        ),
        grid_spec=pltpu.PrefetchScalarGridSpec(
            num_scalar_prefetch=0,
            grid=grid,
            in_specs=[
                pl.BlockSpec(memory_space=pltpu.SMEM),       # exp(logit_scale)
                pl.BlockSpec((TA, D), lambda i, j: (i, 0)),  # 'a' tile (held across j)
                b_spec,                                      # 'b' tile / resident panel
            ],
            out_specs=(
                pl.BlockSpec((TA, TB), lambda i, j: (i, j)),  # a @ b.T
                pl.BlockSpec((TB, TA), lambda i, j: (j, i)),  # (a @ b.T).T
            ),
        ),
        compiler_params=pltpu.CompilerParams(
            dimension_semantics=("parallel", "parallel"),
            vmem_limit_bytes=vmem_limit,
        ),
        cost_estimate=pl.CostEstimate(
            flops=2 * A_pad * B_pad * D,
            transcendentals=0,
            bytes_accessed=(
                A_pad * D * in_itemsize
                + b_read_bytes
                + 2 * A_pad * B_pad * out_itemsize
            ),
        ),
    )(scale_arr, a, b)

    return out_ab[:A, :B], out_ba[:B, :A]


def clip_similaritys(image_features, text_features, logit_scale, *, tm=512, tn=512):
    """Pallas TPU implementation of CLIP_similaritys.forward.

    Args:
      image_features: [M, D]
      text_features:  [N, D]
      logit_scale:    scalar parameter (pre-exp, i.e. log(1/0.07))
      tm, tn:         max tile sizes along the image / text batch dims
                      (multiples of 128; 512 default).
    Returns:
      (logits_per_image [M, N], logits_per_text [N, M])
    """
    M, D = image_features.shape
    N, Dt = text_features.shape
    assert D == Dt, "feature dims must match"
    in_itemsize = jnp.dtype(image_features.dtype).itemsize

    # exp once, outside the grid; the kernel only does one scalar multiply/tile.
    scale_arr = jnp.exp(jnp.asarray(logit_scale, jnp.float32)).reshape((1,))

    # Only the inner-varying operand pays HBM re-reads; pick roles so that the
    # operand that can be made fully VMEM-resident plays that role.
    M_pad128 = _round_up(max(M, 1), 128)
    N_pad128 = _round_up(max(N, 1), 128)
    txt_fits = 2 * N_pad128 * D * in_itemsize <= _RESIDENT_BUDGET
    img_fits = 2 * M_pad128 * D * in_itemsize <= _RESIDENT_BUDGET
    swap = (not txt_fits) and img_fits and (M_pad128 > tm)

    if swap:
        lt, li = _clip_matmul(text_features, image_features, scale_arr, tn, tm)
    else:
        li, lt = _clip_matmul(image_features, text_features, scale_arr, tm, tn)
    return li, lt


if __name__ == "__main__":
    key = jax.random.PRNGKey(0)
    k1, k2, k3, k4 = jax.random.split(key, 4)

    # Deterministic parameter init, same as nn.Parameter(ones([]) * log(1/0.07))
    logit_scale = jnp.float32(math.log(1.0 / 0.07))

    # Small shapes consistent with the module: 8 images, 16 texts, embed dim 32.
    M, N, D = 8, 16, 32
    image_features = jax.random.normal(k1, (M, D), dtype=jnp.float32)
    text_features = jax.random.normal(k2, (N, D), dtype=jnp.float32)

    logits_per_image, logits_per_text = clip_similaritys(
        image_features, text_features, logit_scale
    )
    jax.block_until_ready((logits_per_image, logits_per_text))

    ref = jnp.exp(logit_scale) * image_features @ text_features.T
    assert logits_per_image.shape == (M, N)
    assert logits_per_text.shape == (N, M)
    assert jnp.allclose(logits_per_image, ref, atol=1e-3, rtol=1e-3)
    assert jnp.allclose(logits_per_text, ref.T, atol=1e-3, rtol=1e-3)

    # Second check exercising padding + multi-tile grid + resident-text path.
    M2, N2, D2 = 300, 700, 96
    img2 = jax.random.normal(k3, (M2, D2), dtype=jnp.float32)
    txt2 = jax.random.normal(k4, (N2, D2), dtype=jnp.float32)
    li2, lt2 = clip_similaritys(img2, txt2, logit_scale)
    jax.block_until_ready((li2, lt2))
    ref2 = jnp.exp(logit_scale) * img2 @ txt2.T
    assert li2.shape == (M2, N2) and lt2.shape == (N2, M2)
    assert jnp.allclose(li2, ref2, atol=2e-3, rtol=2e-3)
    assert jnp.allclose(lt2, ref2.T, atol=2e-3, rtol=2e-3)

    print("KERNEL_OK")
</pallas_src>

<mosaic_0001>
module attributes {stable_mosaic.version = 11 : i64} {
  func.func @kernel(%arg0: i32, %arg1: i32, %arg2: memref<1xf32, #tpu.memory_space<smem>>, %arg3: memref<128x32xf32, #tpu.memory_space<vmem>>, %arg4: memref<128x32xf32, #tpu.memory_space<vmem>>, %arg5: memref<128x128xf32, #tpu.memory_space<vmem>>, %arg6: memref<128x128xf32, #tpu.memory_space<vmem>>) attributes {dimension_semantics = [#tpu.dimension_semantics<parallel>, #tpu.dimension_semantics<parallel>], iteration_bounds = array<i64: 1, 1>, scalar_prefetch = 0 : i64, scratch_operands = 0 : i64, tpu.core_type = #tpu.core_type<tc>, window_params = [{transform_indices = @transform_0, window_bounds = array<i64: 1>}, {transform_indices = @transform_1, window_bounds = array<i64: 128, 32>}, {transform_indices = @transform_2, window_bounds = array<i64: 128, 32>}, {transform_indices = @transform_3, window_bounds = array<i64: 128, 128>}, {transform_indices = @transform_4, window_bounds = array<i64: 128, 128>}]} {
    %c0 = arith.constant 0 : index
    %0 = memref.load %arg2[%c0] : memref<1xf32, #tpu.memory_space<smem>>
    %c0_0 = arith.constant 0 : index
    %c0_1 = arith.constant 0 : index
    %1 = vector.load %arg3[%c0_0, %c0_1] : memref<128x32xf32, #tpu.memory_space<vmem>>, vector<128x32xf32>
    %c0_2 = arith.constant 0 : index
    %c0_3 = arith.constant 0 : index
    %2 = vector.load %arg4[%c0_2, %c0_3] : memref<128x32xf32, #tpu.memory_space<vmem>>, vector<128x32xf32>
    %cst = arith.constant dense<0.000000e+00> : vector<128x128xf32>
    %3 = tpu.matmul %1, %2, %cst {dimension_numbers = #tpu.dot_dimension_numbers<[1], [1], [0], [0], [0, 0, 1, 0], [], []>} : vector<128x32xf32>, vector<128x32xf32>, vector<128x128xf32> -> vector<128x128xf32>
    %4 = vector.broadcast %0 : f32 to vector<128x128xf32>
    %5 = arith.mulf %4, %3 : vector<128x128xf32>
    %c0_4 = arith.constant 0 : index
    %c0_5 = arith.constant 0 : index
    %6 = vector.load %arg5[%c0_4, %c0_5] : memref<128x128xf32, #tpu.memory_space<vmem>>, vector<128x128xf32>
    tpu.vector_store %arg5[%c0_4, %c0_5], %5 {strides = array<i32>} : memref<128x128xf32, #tpu.memory_space<vmem>>, vector<128x128xf32>,
    %7 = tpu.transpose %5, [1, 0] : vector<128x128xf32> -> vector<128x128xf32>
    %c0_6 = arith.constant 0 : index
    %c0_7 = arith.constant 0 : index
    %8 = vector.load %arg6[%c0_6, %c0_7] : memref<128x128xf32, #tpu.memory_space<vmem>>, vector<128x128xf32>
    tpu.vector_store %arg6[%c0_6, %c0_7], %7 {strides = array<i32>} : memref<128x128xf32, #tpu.memory_space<vmem>>, vector<128x128xf32>,
    return
  }
  func.func @transform_0(%arg0: i32, %arg1: i32) -> i32 {
    %c0_i32 = arith.constant 0 : i32
    %c0_i32_0 = arith.constant 0 : i32
    return %c0_i32 : i32
  }
  func.func @transform_1(%arg0: i32, %arg1: i32) -> (i32, i32) {
    %c0_i32 = arith.constant 0 : i32
    %c0_i32_0 = arith.constant 0 : i32
    return %arg0, %c0_i32 : i32, i32
  }
  func.func @transform_2(%arg0: i32, %arg1: i32) -> (i32, i32) {
    %c0_i32 = arith.constant 0 : i32
    %c0_i32_0 = arith.constant 0 : i32
    return %arg1, %c0_i32 : i32, i32
  }
  func.func @transform_3(%arg0: i32, %arg1: i32) -> (i32, i32) {
    %c0_i32 = arith.constant 0 : i32
    return %arg0, %arg1 : i32, i32
  }
  func.func @transform_4(%arg0: i32, %arg1: i32) -> (i32, i32) {
    %c0_i32 = arith.constant 0 : i32
    return %arg1, %arg0 : i32, i32
  }
}

</mosaic_0001>

<llo_original>
// kernel: tpu_custom_call.1
$region0: #{tpu_custom_call.1}
  #allocation0 [shape = 'u32[]', space=smem, size = 0x4, offset = 0x4, fixed_abs, tag = 'smem constant byte address 0x4 - core index']
  #allocation1 [shape = 'u32[144,128]{1,0:T(1,128)}', space=vmem, size = 0x12000, scoped, tag = 'internal scratch']
  #allocation2 [shape = 'f32[1]{0:T(128)S(6)}', space=smem, size = 0x200, scoped, tag = 'scoped memory for tpu_custom_call.1']
  %s0 = inlined_call_operand.<no memory space> [shape: f32[1], index: 0, kind: input, shape index: {}]
  %s1 = inlined_call_operand.vmem [shape: f32[128,32], index: 1, kind: input, shape index: {}]
  %s2 = inlined_call_operand.vmem [shape: f32[128,32], index: 2, kind: input, shape index: {}]
  %s3 = inlined_call_operand.hbm [shape: f32[128,128], index: 3, kind: output, shape index: {0}]
  %s4 = inlined_call_operand.hbm [shape: f32[128,128], index: 4, kind: output, shape index: {1}]
  %5 = xla_tuple %s3, %s4
  %s6 = sld [smem:[#allocation0]]
  $region30: #{tpu_custom_call.1} parent=0
    _
  %s8 = ssub.s32 1, %s6
  %s9 = scalar_select 0, %s8, %s6
  %10 = sst [smem:[#allocation2]] %s0
  $region1: #{tpu_custom_call.1} parent=0
    #allocation3 [shape = 'u8[65536]{0}', space=vmem, size = 0x10000, scoped, tag = 'output window, operand 0, single buffered']
    #allocation4 [shape = 's32[1]{0}', space=sflag, size = 0x4, scoped, tag = 'scoped memory for tpu_custom_call.1']
    #allocation5 [shape = 'u8[65536]{0}', space=vmem, size = 0x10000, scoped, tag = 'output window, operand 1, single buffered']
    #allocation6 [shape = 's32[1]{0}', space=sflag, size = 0x4, scoped, tag = 'scoped memory for tpu_custom_call.1']
    %11 = vsyncpa [#allocation4], 0
    %12 = vsyncpa [#allocation6], 0
    // Predicated region
    $region2: #{tpu_custom_call.1} parent=1 // pred_check
      _
    $region3: #{tpu_custom_call.1} parent=1 // pred_check_branch
      %14 = sbr.rel (0) target = $region5
    $region4: #{tpu_custom_call.1} parent=1 // pred_region
      _
    $region5: #{tpu_custom_call.1} parent=1 // pred_fallthru
      _
    // Predicated region
    $region6: #{tpu_custom_call.1} parent=1 // pred_check
      _
    $region7: #{tpu_custom_call.1} parent=1 // pred_check_branch
      %16 = sbr.rel (0) target = $region9
    $region8: #{tpu_custom_call.1} parent=1 // pred_region
      _
    $region9: #{tpu_custom_call.1} parent=1 // pred_fallthru
      _
    // Predicated region
    $region10: #{tpu_custom_call.1} parent=1 // pred_check
      _
    $region11: #{tpu_custom_call.1} parent=1 // pred_check_branch
      %18 = sbr.rel (0) target = $region13
    $region12: #{tpu_custom_call.1} parent=1 // pred_region
      _
    $region13: #{tpu_custom_call.1} parent=1 // pred_fallthru
      _
    %s19 = sld [smem:[#allocation2]]
    %v20 = vld [vmem:[%s1] sm:$0xff]
    %v21 = vld [vmem:[%s1 + $0x8] sm:$0xff]
    %v22 = vld [vmem:[%s1 + $0x10] sm:$0xff]
    %v23 = vld [vmem:[%s1 + $0x18] sm:$0xff]
    %v24 = vld [vmem:[%s1 + $0x20] sm:$0xff]
    %v25 = vld [vmem:[%s1 + $0x28] sm:$0xff]
    %v26 = vld [vmem:[%s1 + $0x30] sm:$0xff]
    %v27 = vld [vmem:[%s1 + $0x38] sm:$0xff]
    %v28 = vld [vmem:[%s1 + $0x40] sm:$0xff]
    %v29 = vld [vmem:[%s1 + $0x48] sm:$0xff]
    %v30 = vld [vmem:[%s1 + $0x50] sm:$0xff]
    %v31 = vld [vmem:[%s1 + $0x58] sm:$0xff]
    %v32 = vld [vmem:[%s1 + $0x60] sm:$0xff]
    %v33 = vld [vmem:[%s1 + $0x68] sm:$0xff]
    %v34 = vld [vmem:[%s1 + $0x70] sm:$0xff]
    %v35 = vld [vmem:[%s1 + $0x78] sm:$0xff]
    %v36 = vld [vmem:[%s2] sm:$0xff]
    %v37 = vld [vmem:[%s2 + $0x8] sm:$0xff]
    %v38 = vld [vmem:[%s2 + $0x10] sm:$0xff]
    %v39 = vld [vmem:[%s2 + $0x18] sm:$0xff]
    %v40 = vld [vmem:[%s2 + $0x20] sm:$0xff]
    %v41 = vld [vmem:[%s2 + $0x28] sm:$0xff]
    %v42 = vld [vmem:[%s2 + $0x30] sm:$0xff]
    %v43 = vld [vmem:[%s2 + $0x38] sm:$0xff]
    %v44 = vld [vmem:[%s2 + $0x40] sm:$0xff]
    %v45 = vld [vmem:[%s2 + $0x48] sm:$0xff]
    %v46 = vld [vmem:[%s2 + $0x50] sm:$0xff]
    %v47 = vld [vmem:[%s2 + $0x58] sm:$0xff]
    %v48 = vld [vmem:[%s2 + $0x60] sm:$0xff]
    %v49 = vld [vmem:[%s2 + $0x68] sm:$0xff]
    %v50 = vld [vmem:[%s2 + $0x70] sm:$0xff]
    %v51 = vld [vmem:[%s2 + $0x78] sm:$0xff]
    %vm52 = vcmask 261120
    %v54 = vsel %vm52, %v20, 0
    %v57 = vsel %vm52, %v21, 0
    %v60 = vsel %vm52, %v22, 0
    %v63 = vsel %vm52, %v23, 0
    %v66 = vsel %vm52, %v24, 0
    %v69 = vsel %vm52, %v25, 0
    %v72 = vsel %vm52, %v26, 0
    %v75 = vsel %vm52, %v27, 0
    %v78 = vsel %vm52, %v28, 0
    %v81 = vsel %vm52, %v29, 0
    %v84 = vsel %vm52, %v30, 0
    %v87 = vsel %vm52, %v31, 0
    %v90 = vsel %vm52, %v32, 0
    %v93 = vsel %vm52, %v33, 0
    %v96 = vsel %vm52, %v34, 0
    %v99 = vsel %vm52, %v35, 0
    %v102 = vsel %vm52, %v36, 0
    %v105 = vsel %vm52, %v37, 0
    %v108 = vsel %vm52, %v38, 0
    %v111 = vsel %vm52, %v39, 0
    %v114 = vsel %vm52, %v40, 0
    %v117 = vsel %vm52, %v41, 0
    %v120 = vsel %vm52, %v42, 0
    %v123 = vsel %vm52, %v43, 0
    %v126 = vsel %vm52, %v44, 0
    %v129 = vsel %vm52, %v45, 0
    %v132 = vsel %vm52, %v46, 0
    %v135 = vsel %vm52, %v47, 0
    %v138 = vsel %vm52, %v48, 0
    %v141 = vsel %vm52, %v49, 0
    %v144 = vsel %vm52, %v50, 0
    %v147 = vsel %vm52, %v51, 0
    %149 = vmatprep.subr.mxu0 0.0
    %150 = vmatpush1.xpose.msra.mxu0 %v147
    %151 = vmatprep.subr.mxu0 0.0
    %152 = vmatpush1.xpose.msra.mxu0 %v144
    %153 = vmatprep.subr.mxu0 0.0
    %154 = vmatpush1.xpose.msra.mxu0 %v141
    %155 = vmatprep.subr.mxu0 0.0
    %156 = vmatpush1.xpose.msra.mxu0 %v138
    %157 = vmatprep.subr.mxu0 0.0
    %158 = vmatpush1.xpose.msra.mxu0 %v135
    %159 = vmatprep.subr.mxu0 0.0
    %160 = vmatpush1.xpose.msra.mxu0 %v132
    %161 = vmatprep.subr.mxu0 0.0
    %162 = vmatpush1.xpose.msra.mxu0 %v129
    %163 = vmatprep.subr.mxu0 0.0
    %164 = vmatpush1.xpose.msra.mxu0 %v126
    %165 = vmatprep.subr.mxu0 0.0
    %166 = vmatpush1.xpose.msra.mxu0 %v123
    %167 = vmatprep.subr.mxu0 0.0
    %168 = vmatpush1.xpose.msra.mxu0 %v120
    %169 = vmatprep.subr.mxu0 0.0
    %170 = vmatpush1.xpose.msra.mxu0 %v117
    %171 = vmatprep.subr.mxu0 0.0
    %172 = vmatpush1.xpose.msra.mxu0 %v114
    %173 = vmatprep.subr.mxu0 0.0
    %174 = vmatpush1.xpose.msra.mxu0 %v111
    %175 = vmatprep.subr.mxu0 0.0
    %176 = vmatpush1.xpose.msra.mxu0 %v108
    %177 = vmatprep.subr.mxu0 0.0
    %178 = vmatpush1.xpose.msra.mxu0 %v105
    %179 = vmatprep.subr.mxu0 0.0
    %180 = vmatpush1.xpose.msra.mxu0 %v102
    %181 = vmatprep.subr.mxu0 0.0
    %182 = vmatpush2.xpose.msra.mxu0 0.0
    %183 = vmatprep.subr.mxu0 0.0
    %184 = vmatpush2.xpose.msra.mxu0 0.0
    %185 = vmatprep.subr.mxu0 0.0
    %186 = vmatpush2.xpose.msra.mxu0 0.0
    %187 = vmatprep.subr.mxu0 0.0
    %188 = vmatpush2.xpose.msra.mxu0 0.0
    %189 = vmatprep.subr.mxu0 0.0
    %190 = vmatpush2.xpose.msra.mxu0 0.0
    %191 = vmatprep.subr.mxu0 0.0
    %192 = vmatpush2.xpose.msra.mxu0 0.0
    %193 = vmatprep.subr.mxu0 0.0
    %194 = vmatpush2.xpose.msra.mxu0 0.0
    %195 = vmatprep.subr.mxu0 0.0
    %196 = vmatpush2.xpose.msra.mxu0 0.0
    %197 = vmatprep.subr.mxu0 0.0
    %198 = vmatpush2.xpose.msra.mxu0 0.0
    %199 = vmatprep.subr.mxu0 0.0
    %200 = vmatpush2.xpose.msra.mxu0 0.0
    %201 = vmatprep.subr.mxu0 0.0
    %202 = vmatpush2.xpose.msra.mxu0 0.0
    %203 = vmatprep.subr.mxu0 0.0
    %204 = vmatpush2.xpose.msra.mxu0 0.0
    %205 = vmatprep.subr.mxu0 0.0
    %206 = vmatpush2.xpose.msra.mxu0 0.0
    %207 = vmatprep.subr.mxu0 0.0
    %208 = vmatpush2.xpose.msra.mxu0 0.0
    %209 = vmatprep.subr.mxu0 0.0
    %210 = vmatpush2.xpose.msra.mxu0 0.0
    %211 = vmatprep.subr.mxu0 0.0
    %212 = vmatpush2.xpose.msra.mxu0 0.0
    %213 = vmatprep.mubr.f32.mxu0 0.0
    %214 = vmatmul.mubr.f32.gmra.mxu0 %v54
    %v215 = vpop.f32.mrf.mxu0
    %v216 = vadd.f32 0.0, %v215
    %v217 = vpop.f32.mrf.mxu0
    %218 = vmatprep.mubr.f32.mxu0 0.0
    %219 = vmatmul.mubr.f32.gmra.mxu0 %v57
    %v220 = vpop.f32.mrf.mxu0
    %v221 = vadd.f32 0.0, %v220
    %v222 = vpop.f32.mrf.mxu0
    %223 = vmatprep.mubr.f32.mxu0 0.0
    %224 = vmatmul.mubr.f32.gmra.mxu0 %v60
    %v225 = vpop.f32.mrf.mxu0
    %v226 = vadd.f32 0.0, %v225
    %v227 = vpop.f32.mrf.mxu0
    %228 = vmatprep.mubr.f32.mxu0 0.0
    %229 = vmatmul.mubr.f32.gmra.mxu0 %v63
    %v230 = vpop.f32.mrf.mxu0
    %v231 = vadd.f32 0.0, %v230
    %v232 = vpop.f32.mrf.mxu0
    %233 = vmatprep.mubr.f32.mxu0 0.0
    %234 = vmatmul.mubr.f32.gmra.mxu0 %v66
    %v235 = vpop.f32.mrf.mxu0
    %v236 = vadd.f32 0.0, %v235
    %v237 = vpop.f32.mrf.mxu0
    %238 = vmatprep.mubr.f32.mxu0 0.0
    %239 = vmatmul.mubr.f32.gmra.mxu0 %v69
    %v240 = vpop.f32.mrf.mxu0
    %v241 = vadd.f32 0.0, %v240
    %v242 = vpop.f32.mrf.mxu0
    %243 = vmatprep.mubr.f32.mxu0 0.0
    %244 = vmatmul.mubr.f32.gmra.mxu0 %v72
    %v245 = vpop.f32.mrf.mxu0
    %v246 = vadd.f32 0.0, %v245
    %v247 = vpop.f32.mrf.mxu0
    %248 = vmatprep.mubr.f32.mxu0 0.0
    %249 = vmatmul.mubr.f32.gmra.mxu0 %v75
    %v250 = vpop.f32.mrf.mxu0
    %v251 = vadd.f32 0.0, %v250
    %v252 = vpop.f32.mrf.mxu0
    %253 = vmatprep.mubr.f32.mxu0 0.0
    %254 = vmatmul.mubr.f32.gmra.mxu0 %v78
    %v255 = vpop.f32.mrf.mxu0
    %v256 = vadd.f32 0.0, %v255
    %v257 = vpop.f32.mrf.mxu0
    %258 = vmatprep.mubr.f32.mxu0 0.0
    %259 = vmatmul.mubr.f32.gmra.mxu0 %v81
    %v260 = vpop.f32.mrf.mxu0
    %v261 = vadd.f32 0.0, %v260
    %v262 = vpop.f32.mrf.mxu0
    %263 = vmatprep.mubr.f32.mxu0 0.0
    %264 = vmatmul.mubr.f32.gmra.mxu0 %v84
    %v265 = vpop.f32.mrf.mxu0
    %v266 = vadd.f32 0.0, %v265
    %v267 = vpop.f32.mrf.mxu0
    %268 = vmatprep.mubr.f32.mxu0 0.0
    %269 = vmatmul.mubr.f32.gmra.mxu0 %v87
    %v270 = vpop.f32.mrf.mxu0
    %v271 = vadd.f32 0.0, %v270
    %v272 = vpop.f32.mrf.mxu0
    %273 = vmatprep.mubr.f32.mxu0 0.0
    %274 = vmatmul.mubr.f32.gmra.mxu0 %v90
    %v275 = vpop.f32.mrf.mxu0
    %v276 = vadd.f32 0.0, %v275
    %v277 = vpop.f32.mrf.mxu0
    %278 = vmatprep.mubr.f32.mxu0 0.0
    %279 = vmatmul.mubr.f32.gmra.mxu0 %v93
    %v280 = vpop.f32.mrf.mxu0
    %v281 = vadd.f32 0.0, %v280
    %v282 = vpop.f32.mrf.mxu0
    %283 = vmatprep.mubr.f32.mxu0 0.0
    %284 = vmatmul.mubr.f32.gmra.mxu0 %v96
    %v285 = vpop.f32.mrf.mxu0
    %v286 = vadd.f32 0.0, %v285
    %v287 = vpop.f32.mrf.mxu0
    %288 = vmatprep.mubr.f32.mxu0 0.0
    %289 = vmatmul.mubr.f32.gmra.mxu0 %v99
    %v290 = vpop.f32.mrf.mxu0
    %v291 = vadd.f32 0.0, %v290
    %v292 = vpop.f32.mrf.mxu0
    %293 = vdwg.mxu0
    %v294 = vstv %s19
    %v295 = vmul.f32 %v294, %v216
    %v296 = vmul.f32 %v294, %v221
    %v297 = vmul.f32 %v294, %v226
    %v298 = vmul.f32 %v294, %v231
    %v299 = vmul.f32 %v294, %v236
    %v300 = vmul.f32 %v294, %v241
    %v301 = vmul.f32 %v294, %v246
    %v302 = vmul.f32 %v294, %v251
    %v303 = vmul.f32 %v294, %v256
    %v304 = vmul.f32 %v294, %v261
    %v305 = vmul.f32 %v294, %v266
    %v306 = vmul.f32 %v294, %v271
    %v307 = vmul.f32 %v294, %v276
    %v308 = vmul.f32 %v294, %v281
    %v309 = vmul.f32 %v294, %v286
    %v310 = vmul.f32 %v294, %v291
    %311 = vst [vmem:[#allocation3] sm:$0xff] %v295
    %312 = vst [vmem:[#allocation3 + $0x8] sm:$0xff] %v296
    %313 = vst [vmem:[#allocation3 + $0x10] sm:$0xff] %v297
    %314 = vst [vmem:[#allocation3 + $0x18] sm:$0xff] %v298
    %315 = vst [vmem:[#allocation3 + $0x20] sm:$0xff] %v299
    %316 = vst [vmem:[#allocation3 + $0x28] sm:$0xff] %v300
    %317 = vst [vmem:[#allocation3 + $0x30] sm:$0xff] %v301
    %318 = vst [vmem:[#allocation3 + $0x38] sm:$0xff] %v302
    %319 = vst [vmem:[#allocation3 + $0x40] sm:$0xff] %v303
    %320 = vst [vmem:[#allocation3 + $0x48] sm:$0xff] %v304
    %321 = vst [vmem:[#allocation3 + $0x50] sm:$0xff] %v305
    %322 = vst [vmem:[#allocation3 + $0x58] sm:$0xff] %v306
    %323 = vst [vmem:[#allocation3 + $0x60] sm:$0xff] %v307
    %324 = vst [vmem:[#allocation3 + $0x68] sm:$0xff] %v308
    %325 = vst [vmem:[#allocation3 + $0x70] sm:$0xff] %v309
    %326 = vst [vmem:[#allocation3 + $0x78] sm:$0xff] %v310
    %327 = vxpose.xlu0.b32.start [1/16] %v295, 128
    %328 = vxpose.xlu0.b32.cont [2/16] %v296, 128
    %329 = vxpose.xlu0.b32.cont [3/16] %v297, 128
    %330 = vxpose.xlu0.b32.cont [4/16] %v298, 128
    %331 = vxpose.xlu0.b32.cont [5/16] %v299, 128
    %332 = vxpose.xlu0.b32.cont [6/16] %v300, 128
    %333 = vxpose.xlu0.b32.cont [7/16] %v301, 128
    %334 = vxpose.xlu0.b32.cont [8/16] %v302, 128
    %335 = vxpose.xlu0.b32.cont [9/16] %v303, 128
    %336 = vxpose.xlu0.b32.cont [10/16] %v304, 128
    %337 = vxpose.xlu0.b32.cont [11/16] %v305, 128
    %338 = vxpose.xlu0.b32.cont [12/16] %v306, 128
    %339 = vxpose.xlu0.b32.cont [13/16] %v307, 128
    %340 = vxpose.xlu0.b32.cont [14/16] %v308, 128
    %341 = vxpose.xlu0.b32.cont [15/16] %v309, 128
    %342 = vxpose.xlu0.b32.end [16/16] %v310, 128
    %v343 = vpop.trf.xlu0
    %v344 = vpop.trf.xlu0
    %v345 = vpop.trf.xlu0
    %v346 = vpop.trf.xlu0
    %v347 = vpop.trf.xlu0
    %v348 = vpop.trf.xlu0
    %v349 = vpop.trf.xlu0
    %v350 = vpop.trf.xlu0
    %v351 = vpop.trf.xlu0
    %v352 = vpop.trf.xlu0
    %v353 = vpop.trf.xlu0
    %v354 = vpop.trf.xlu0
    %v355 = vpop.trf.xlu0
    %v356 = vpop.trf.xlu0
    %v357 = vpop.trf.xlu0
    %v358 = vpop.trf.xlu0
    %359 = vst [vmem:[#allocation5] sm:$0xff] %v343
    %360 = vst [vmem:[#allocation5 + $0x8] sm:$0xff] %v344
    %361 = vst [vmem:[#allocation5 + $0x10] sm:$0xff] %v345
    %362 = vst [vmem:[#allocation5 + $0x18] sm:$0xff] %v346
    %363 = vst [vmem:[#allocation5 + $0x20] sm:$0xff] %v347
    %364 = vst [vmem:[#allocation5 + $0x28] sm:$0xff] %v348
    %365 = vst [vmem:[#allocation5 + $0x30] sm:$0xff] %v349
    %366 = vst [vmem:[#allocation5 + $0x38] sm:$0xff] %v350
    %367 = vst [vmem:[#allocation5 + $0x40] sm:$0xff] %v351
    %368 = vst [vmem:[#allocation5 + $0x48] sm:$0xff] %v352
    %369 = vst [vmem:[#allocation5 + $0x50] sm:$0xff] %v353
    %370 = vst [vmem:[#allocation5 + $0x58] sm:$0xff] %v354
    %371 = vst [vmem:[#allocation5 + $0x60] sm:$0xff] %v355
    %372 = vst [vmem:[#allocation5 + $0x68] sm:$0xff] %v356
    %373 = vst [vmem:[#allocation5 + $0x70] sm:$0xff] %v357
    %374 = vst [vmem:[#allocation5 + $0x78] sm:$0xff] %v358
    // Predicated region
    $region14: #{tpu_custom_call.1} parent=1 // pred_check
      _
    $region15: #{tpu_custom_call.1} parent=1 // pred_check_branch
      %376 = sbr.rel (0) target = $region17
    $region16: #{tpu_custom_call.1} parent=1 // pred_region
      %s378 = ssub.s32 2048, 2048
      %379 = vsyncadd [#allocation4], %s378
      %s380 = sshll.u32 [#allocation3], 4
      %s381 = int_to_ptr.vmem [resolvable:$true] %s380
      %386 = dma.vmem_to_hbm [thread:$0]  %s381, 2048, %s3, [#allocation4], 128, 128, 8
    $region17: #{tpu_custom_call.1} parent=1 // pred_fallthru
      _
    // Predicated region
    $region18: #{tpu_custom_call.1} parent=1 // pred_check
      _
    $region19: #{tpu_custom_call.1} parent=1 // pred_check_branch
      %388 = sbr.rel (0) target = $region21
    $region20: #{tpu_custom_call.1} parent=1 // pred_region
      %s390 = ssub.s32 2048, 2048
      %391 = vsyncadd [#allocation6], %s390
      %s392 = sshll.u32 [#allocation5], 4
      %s393 = int_to_ptr.vmem [resolvable:$true] %s392
      %398 = dma.vmem_to_hbm [thread:$0]  %s393, 2048, %s4, [#allocation6], 128, 128, 8
    $region21: #{tpu_custom_call.1} parent=1 // pred_fallthru
      _
    // Predicated region
    $region22: #{tpu_custom_call.1} parent=1 // pred_check
      _
    $region23: #{tpu_custom_call.1} parent=1 // pred_check_branch
      %400 = sbr.rel (0) target = $region25
    $region24: #{tpu_custom_call.1} parent=1 // pred_region
      %401 = dma.done [#allocation4], 2048
    $region25: #{tpu_custom_call.1} parent=1 // pred_fallthru
      _
    // Predicated region
    $region26: #{tpu_custom_call.1} parent=1 // pred_check
      _
    $region27: #{tpu_custom_call.1} parent=1 // pred_check_branch
      %403 = sbr.rel (0) target = $region29
    $region28: #{tpu_custom_call.1} parent=1 // pred_region
      %404 = dma.done [#allocation6], 2048
    $region29: #{tpu_custom_call.1} parent=1 // pred_fallthru
      _
    %405 = vsyncpa [#allocation4], 1
    %406 = vsyncpa [#allocation6], 1

</llo_original>
